<compile_context>
chip_gen: v7x
topology: tpu7x:2x2x1
jax: 0.10.0
libtpu: 0.0.40
codegen_flags: <defaults>
</compile_context>

<pallas_src>
import jax
import jax.numpy as jnp
from jax.experimental import pallas as pl
from jax.experimental.pallas import tpu as pltpu


def pam_kernel(x_ref, wqt_ref, bq_ref, wk_ref, bk_ref, wv_ref, bv_ref,
               gamma_ref, out_ref, k_sc, v_sc):
    t = pl.program_id(1)
    c, tq = out_ref.shape  # (C, TQ)

    # Hoisted per-batch work: key row and (ones-augmented) value projection.
    @pl.when(t == 0)
    def _init():
        x = x_ref[...]                                                   # (C, N)
        k_sc[...] = (jnp.dot(wk_ref[...], x,
                             preferred_element_type=jnp.float32)
                     + bk_ref[...])                                      # (1, N)
        v_sc[...] = (jnp.dot(wv_ref[...], x,
                             preferred_element_type=jnp.float32)
                     + bv_ref[...])                                      # (C+1, N), last row == 1

    start = pl.multiple_of(t * tq, tq)
    x_tile = x_ref[:, pl.ds(start, tq)]                                  # (C, TQ)

    # Query tile directly in column layout: (TQ, 1) = x_tile^T @ wq^T + bq.
    q_col = jax.lax.dot_general(
        x_tile, wqt_ref[...], (((0,), (0,)), ((), ())),
        preferred_element_type=jnp.float32) + bq_ref[...]                # (TQ, 1)

    # Rank-1 energy on the VPU (no K=1 MXU matmul, no (N, N) buffer).
    energy = q_col * k_sc[...]                                           # (TQ, N)
    e_max = jnp.max(energy, axis=-1, keepdims=True)                      # (TQ, 1)
    p = jnp.exp(energy - e_max)                                          # (TQ, N)

    # One MXU matmul gives both the unnormalized output (rows 0..C-1) and the
    # softmax row sums (row C, from the appended ones row of V).
    out_aug = jax.lax.dot_general(
        v_sc[...], p, (((1,), (1,)), ((), ())),
        preferred_element_type=jnp.float32)                              # (C+1, TQ)

    denom = out_aug[c:c + 1, :]                                          # (1, TQ)
    inv = pl.reciprocal(denom, approx=True)                              # EUP slot
    inv = inv * (2.0 - denom * inv)                                      # one Newton step

    out_ref[...] = gamma_ref[...] * (out_aug[0:c, :] * inv) + x_tile


def _pick_tq(n, target=256):
    """Largest multiple of 128 that divides n and is <= target (else n)."""
    if n <= target or n % 128 != 0:
        return n
    tq = (min(target, n) // 128) * 128
    while tq >= 128:
        if n % tq == 0:
            return tq
        tq -= 128
    return n


def pam_forward(x, wq, bq, wk, bk, wv, bv, gamma, *, tq=None):
    B, C, H, W = x.shape
    N = H * W
    xr = x.reshape(B, C, N)

    if tq is None:
        tq = _pick_tq(N)
    assert N % tq == 0, "query tile must divide N"
    n_tiles = N // tq

    # Host-side parameter reshaping:
    #  * wq transposed to (C, 1) so the per-tile q projection yields a column.
    #  * ones row appended to the value projection so the same matmul also
    #    produces the softmax denominators.
    wq_t = jnp.transpose(wq)                                             # (C, 1)
    wv_aug = jnp.concatenate([wv, jnp.zeros((1, C), wv.dtype)], axis=0)  # (C+1, C)
    bv_aug = jnp.concatenate([bv, jnp.ones((1, 1), bv.dtype)], axis=0)   # (C+1, 1)

    fbytes = jnp.dtype(jnp.float32).itemsize
    resident = fbytes * (
        2 * C * N                       # x block (double-buffered across batches)
        + (C + 1) * N + N               # v / k scratch
        + 4 * tq * N                    # energy / p tile + temporaries
        + 2 * C * tq + (C + 1) * tq     # out block (x2) + out_aug
        + (C + 1) * (C + 4)             # weights / biases / gamma
    )
    try:
        phys_vmem = pltpu.get_tpu_info().vmem_capacity_bytes
    except Exception:
        phys_vmem = 64 * 1024 * 1024
    vmem_limit = int(min(max(2 * resident, 8 * 1024 * 1024),
                         (3 * phys_vmem) // 4))

    flops = B * (
        2 * C * N                       # key projection
        + 2 * (C + 1) * C * N           # value projection (+ ones row)
        + 2 * C * N                     # query projections (all tiles)
        + 4 * N * N                     # energy outer product + max/sub
        + 2 * (C + 1) * N * N           # V_aug @ P^T
        + 4 * C * N                     # normalize, gamma, residual
    )
    cost = pl.CostEstimate(
        flops=flops,
        transcendentals=B * (N * N + N),
        bytes_accessed=fbytes * (2 * B * C * N + (C + 1) * C + 4 * C + 8),
    )

    out = pl.pallas_call(
        pam_kernel,
        out_shape=jax.ShapeDtypeStruct((B, C, N), jnp.float32),
        grid_spec=pltpu.PrefetchScalarGridSpec(
            num_scalar_prefetch=0,
            grid=(B, n_tiles),
            in_specs=[
                pl.BlockSpec((None, C, N), lambda b, t: (b, 0, 0)),   # x[b] (resident)
                pl.BlockSpec((C, 1), lambda b, t: (0, 0)),            # Wq^T
                pl.BlockSpec((1, 1), lambda b, t: (0, 0)),            # bq
                pl.BlockSpec((1, C), lambda b, t: (0, 0)),            # Wk
                pl.BlockSpec((1, 1), lambda b, t: (0, 0)),            # bk
                pl.BlockSpec((C + 1, C), lambda b, t: (0, 0)),        # Wv (+ zeros row)
                pl.BlockSpec((C + 1, 1), lambda b, t: (0, 0)),        # bv (+ one)
                pl.BlockSpec((1, 1), lambda b, t: (0, 0)),            # gamma
            ],
            out_specs=pl.BlockSpec((None, C, tq), lambda b, t: (b, 0, t)),
            scratch_shapes=[
                pltpu.VMEM((1, N), jnp.float32),       # k (per batch)
                pltpu.VMEM((C + 1, N), jnp.float32),   # v + ones row (per batch)
            ],
        ),
        compiler_params=pltpu.CompilerParams(
            dimension_semantics=("parallel", "arbitrary"),
            vmem_limit_bytes=vmem_limit,
        ),
        cost_estimate=cost,
    )(xr, wq_t, bq, wk, bk, wv_aug, bv_aug, gamma)

    return out.reshape(B, C, H, W)


def pam_reference(x, wq, bq, wk, bk, wv, bv, gamma):
    """Plain-JAX mirror of PAM_Module.forward for correctness checking."""
    B, C, H, W = x.shape
    N = H * W
    xr = x.reshape(B, C, N)
    q = jnp.einsum('oc,bcn->bon', wq, xr) + bq[None]     # (B, 1, N)
    k = jnp.einsum('oc,bcn->bon', wk, xr) + bk[None]     # (B, 1, N)
    v = jnp.einsum('oc,bcn->bon', wv, xr) + bv[None]     # (B, C, N)
    energy = jnp.einsum('bqi,bqj->bij', q, k)            # (B, N, N)
    att = jax.nn.softmax(energy, axis=-1)
    out = jnp.einsum('bcj,bij->bci', v, att)             # (B, C, N)
    y = gamma.reshape(()) * out + xr
    return y.reshape(B, C, H, W)


if __name__ == "__main__":
    B, C, H, W = 2, 4, 16, 16
    key = jax.random.PRNGKey(0)
    kx, kq, kk, kv, kbq, kbk, kbv = jax.random.split(key, 7)

    x = jax.random.normal(kx, (B, C, H, W), dtype=jnp.float32)

    # Conv2d 1x1 kernels flattened to 2-D matrices.
    wq = 0.2 * jax.random.normal(kq, (1, C), dtype=jnp.float32)
    wk = 0.2 * jax.random.normal(kk, (1, C), dtype=jnp.float32)
    wv = 0.2 * jax.random.normal(kv, (C, C), dtype=jnp.float32)
    bq = 0.1 * jax.random.normal(kbq, (1, 1), dtype=jnp.float32)
    bk = 0.1 * jax.random.normal(kbk, (1, 1), dtype=jnp.float32)
    bv = 0.1 * jax.random.normal(kbv, (C, 1), dtype=jnp.float32)
    # PyTorch initializes gamma to 0 (forward then returns x); use a nonzero
    # value so the attention path is actually exercised by the check.
    gamma = jnp.full((1, 1), 0.5, dtype=jnp.float32)

    # tq=128 with N=256 exercises the multi-tile (query-tiled) path.
    out = pam_forward(x, wq, bq, wk, bk, wv, bv, gamma, tq=128)
    out = jax.block_until_ready(out)

    ref = pam_reference(x, wq, bq, wk, bk, wv, bv, gamma)
    assert out.shape == (B, C, H, W)
    # Tolerance leaves headroom for the approx-reciprocal (+ Newton refinement)
    # softmax normalization; observed error is far below this.
    assert jnp.allclose(out, ref, atol=1e-3, rtol=1e-3), "mismatch vs reference"

    print("KERNEL_OK")
</pallas_src>

<mosaic_0001>
module attributes {stable_mosaic.version = 11 : i64} {
  func.func @pam_kernel(%arg0: i32, %arg1: i32, %arg2: memref<1x4x256xf32, #tpu.memory_space<vmem>>, %arg3: memref<4x1xf32, #tpu.memory_space<vmem>>, %arg4: memref<1x1xf32, #tpu.memory_space<vmem>>, %arg5: memref<1x4xf32, #tpu.memory_space<vmem>>, %arg6: memref<1x1xf32, #tpu.memory_space<vmem>>, %arg7: memref<5x4xf32, #tpu.memory_space<vmem>>, %arg8: memref<5x1xf32, #tpu.memory_space<vmem>>, %arg9: memref<1x1xf32, #tpu.memory_space<vmem>>, %arg10: memref<1x4x128xf32, #tpu.memory_space<vmem>>, %arg11: memref<1x256xf32, #tpu.memory_space<vmem>>, %arg12: memref<5x256xf32, #tpu.memory_space<vmem>>) attributes {dimension_semantics = [#tpu.dimension_semantics<parallel>, #tpu.dimension_semantics<arbitrary>], iteration_bounds = array<i64: 2, 2>, scalar_prefetch = 0 : i64, scratch_operands = 2 : i64, tpu.core_type = #tpu.core_type<tc>, window_params = [{transform_indices = @transform_0, window_bounds = array<i64: 1, 4, 256>}, {pipeline_mode = #tpu.pipeline_mode<synchronous>, transform_indices = @transform_1, window_bounds = array<i64: 4, 1>}, {pipeline_mode = #tpu.pipeline_mode<synchronous>, transform_indices = @transform_2, window_bounds = array<i64: 1, 1>}, {pipeline_mode = #tpu.pipeline_mode<synchronous>, transform_indices = @transform_3, window_bounds = array<i64: 1, 4>}, {pipeline_mode = #tpu.pipeline_mode<synchronous>, transform_indices = @transform_4, window_bounds = array<i64: 1, 1>}, {pipeline_mode = #tpu.pipeline_mode<synchronous>, transform_indices = @transform_5, window_bounds = array<i64: 5, 4>}, {pipeline_mode = #tpu.pipeline_mode<synchronous>, transform_indices = @transform_6, window_bounds = array<i64: 5, 1>}, {pipeline_mode = #tpu.pipeline_mode<synchronous>, transform_indices = @transform_7, window_bounds = array<i64: 1, 1>}, {transform_indices = @transform_8, window_bounds = array<i64: 1, 4, 128>}]} {
    %c0_i32 = arith.constant 0 : i32
    %0 = arith.cmpi eq, %arg1, %c0_i32 : i32
    %1 = arith.extui %0 : i1 to i32
    %c0_i32_0 = arith.constant 0 : i32
    %2 = arith.cmpi ne, %1, %c0_i32_0 : i32
    scf.if %2 {
      %c0_18 = arith.constant 0 : index
      %c0_19 = arith.constant 0 : index
      %c0_20 = arith.constant 0 : index
      %40 = vector.load %arg2[%c0_18, %c0_19, %c0_20] : memref<1x4x256xf32, #tpu.memory_space<vmem>>, vector<1x4x256xf32>
      %41 = vector.shape_cast %40 : vector<1x4x256xf32> to vector<4x256xf32>
      %c0_21 = arith.constant 0 : index
      %c0_22 = arith.constant 0 : index
      %42 = vector.load %arg5[%c0_21, %c0_22] : memref<1x4xf32, #tpu.memory_space<vmem>>, vector<1x4xf32>
      %cst_23 = arith.constant dense<0.000000e+00> : vector<1x256xf32>
      %43 = tpu.matmul %42, %41, %cst_23 {dimension_numbers = #tpu.dot_dimension_numbers<[1], [0], [0], [1], [0, 0, 1, 1], [], []>} : vector<1x4xf32>, vector<4x256xf32>, vector<1x256xf32> -> vector<1x256xf32>
      %c0_24 = arith.constant 0 : index
      %c0_25 = arith.constant 0 : index
      %44 = vector.load %arg6[%c0_24, %c0_25] : memref<1x1xf32, #tpu.memory_space<vmem>>, vector<1x1xf32>
      %45 = vector.broadcast %44 : vector<1x1xf32> to vector<1x256xf32>
      %46 = arith.addf %43, %45 : vector<1x256xf32>
      %c0_26 = arith.constant 0 : index
      %c0_27 = arith.constant 0 : index
      %47 = vector.load %arg11[%c0_26, %c0_27] : memref<1x256xf32, #tpu.memory_space<vmem>>, vector<1x256xf32>
      tpu.vector_store %arg11[%c0_26, %c0_27], %46 {strides = array<i32>} : memref<1x256xf32, #tpu.memory_space<vmem>>, vector<1x256xf32>,
      %c0_28 = arith.constant 0 : index
      %c0_29 = arith.constant 0 : index
      %48 = vector.load %arg7[%c0_28, %c0_29] : memref<5x4xf32, #tpu.memory_space<vmem>>, vector<5x4xf32>
      %cst_30 = arith.constant dense<0.000000e+00> : vector<5x256xf32>
      %49 = tpu.matmul %48, %41, %cst_30 {dimension_numbers = #tpu.dot_dimension_numbers<[1], [0], [0], [1], [0, 0, 1, 1], [], []>} : vector<5x4xf32>, vector<4x256xf32>, vector<5x256xf32> -> vector<5x256xf32>
      %c0_31 = arith.constant 0 : index
      %c0_32 = arith.constant 0 : index
      %50 = vector.load %arg8[%c0_31, %c0_32] : memref<5x1xf32, #tpu.memory_space<vmem>>, vector<5x1xf32>
      %51 = vector.broadcast %50 : vector<5x1xf32> to vector<5x256xf32>
      %52 = arith.addf %49, %51 : vector<5x256xf32>
      %c0_33 = arith.constant 0 : index
      %c0_34 = arith.constant 0 : index
      %53 = vector.load %arg12[%c0_33, %c0_34] : memref<5x256xf32, #tpu.memory_space<vmem>>, vector<5x256xf32>
      tpu.vector_store %arg12[%c0_33, %c0_34], %52 {strides = array<i32>} : memref<5x256xf32, #tpu.memory_space<vmem>>, vector<5x256xf32>,
    } else {
    }
    %c128_i32 = arith.constant 128 : i32
    %3 = arith.muli %arg1, %c128_i32 : i32
    %4 = tpu.assume_multiple %3, 128 : i32
    %c0 = arith.constant 0 : index
    %c0_1 = arith.constant 0 : index
    %5 = arith.index_cast %4 : i32 to index
    %6 = vector.load %arg2[%c0, %c0_1, %5] : memref<1x4x256xf32, #tpu.memory_space<vmem>>, vector<1x4x128xf32>
    %7 = vector.shape_cast %6 : vector<1x4x128xf32> to vector<4x128xf32>
    %c0_2 = arith.constant 0 : index
    %c0_3 = arith.constant 0 : index
    %8 = vector.load %arg3[%c0_2, %c0_3] : memref<4x1xf32, #tpu.memory_space<vmem>>, vector<4x1xf32>
    %cst = arith.constant dense<0.000000e+00> : vector<128x1xf32>
    %9 = tpu.matmul %7, %8, %cst {dimension_numbers = #tpu.dot_dimension_numbers<[0], [0], [1], [1], [0, 1, 1, 1], [], []>} : vector<4x128xf32>, vector<4x1xf32>, vector<128x1xf32> -> vector<128x1xf32>
    %c0_4 = arith.constant 0 : index
    %c0_5 = arith.constant 0 : index
    %10 = vector.load %arg4[%c0_4, %c0_5] : memref<1x1xf32, #tpu.memory_space<vmem>>, vector<1x1xf32>
    %11 = vector.broadcast %10 : vector<1x1xf32> to vector<128x1xf32>
    %12 = arith.addf %9, %11 : vector<128x1xf32>
    %c0_6 = arith.constant 0 : index
    %c0_7 = arith.constant 0 : index
    %13 = vector.load %arg11[%c0_6, %c0_7] : memref<1x256xf32, #tpu.memory_space<vmem>>, vector<1x256xf32>
    %14 = vector.broadcast %12 : vector<128x1xf32> to vector<128x256xf32>
    %15 = vector.broadcast %13 : vector<1x256xf32> to vector<128x256xf32>
    %16 = arith.mulf %14, %15 : vector<128x256xf32>
    %cst_8 = arith.constant dense<0xFF800000> : vector<128xf32>
    %17 = vector.multi_reduction <maximumf>, %16, %cst_8 [1] : vector<128x256xf32> to vector<128xf32>
    %18 = vector.shape_cast %17 : vector<128xf32> to vector<128x1xf32>
    %19 = vector.broadcast %18 : vector<128x1xf32> to vector<128x256xf32>
    %20 = arith.subf %16, %19 : vector<128x256xf32>
    %21 = math.exp %20 : vector<128x256xf32>
    %c0_9 = arith.constant 0 : index
    %c0_10 = arith.constant 0 : index
    %22 = vector.load %arg12[%c0_9, %c0_10] : memref<5x256xf32, #tpu.memory_space<vmem>>, vector<5x256xf32>
    %cst_11 = arith.constant dense<0.000000e+00> : vector<5x128xf32>
    %23 = tpu.matmul %22, %21, %cst_11 {dimension_numbers = #tpu.dot_dimension_numbers<[1], [1], [0], [0], [0, 0, 1, 0], [], []>} : vector<5x256xf32>, vector<128x256xf32>, vector<5x128xf32> -> vector<5x128xf32>
    %24 = vector.extract_strided_slice %23 {offsets = [4, 0], sizes = [1, 128], strides = [1, 1]} : vector<5x128xf32> to vector<1x128xf32>
    %25 = tpu.reciprocal %24 {approx = true} : vector<1x128xf32> -> vector<1x128xf32>
    %26 = arith.mulf %24, %25 : vector<1x128xf32>
    %cst_12 = arith.constant 2.000000e+00 : f32
    %27 = vector.broadcast %cst_12 : f32 to vector<1x128xf32>
    %28 = arith.subf %27, %26 : vector<1x128xf32>
    %29 = arith.mulf %25, %28 : vector<1x128xf32>
    %c0_13 = arith.constant 0 : index
    %c0_14 = arith.constant 0 : index
    %30 = vector.load %arg9[%c0_13, %c0_14] : memref<1x1xf32, #tpu.memory_space<vmem>>, vector<1x1xf32>
    %31 = vector.extract_strided_slice %23 {offsets = [0, 0], sizes = [4, 128], strides = [1, 1]} : vector<5x128xf32> to vector<4x128xf32>
    %32 = vector.broadcast %29 : vector<1x128xf32> to vector<4x128xf32>
    %33 = arith.mulf %31, %32 : vector<4x128xf32>
    %34 = vector.broadcast %30 : vector<1x1xf32> to vector<4x128xf32>
    %35 = arith.mulf %34, %33 : vector<4x128xf32>
    %36 = arith.addf %35, %7 : vector<4x128xf32>
    %c0_15 = arith.constant 0 : index
    %c0_16 = arith.constant 0 : index
    %c0_17 = arith.constant 0 : index
    %37 = vector.load %arg10[%c0_15, %c0_16, %c0_17] : memref<1x4x128xf32, #tpu.memory_space<vmem>>, vector<1x4x128xf32>
    %38 = vector.shape_cast %37 : vector<1x4x128xf32> to vector<4x128xf32>
    %39 = vector.shape_cast %36 : vector<4x128xf32> to vector<1x4x128xf32>
    tpu.vector_store %arg10[%c0_15, %c0_16, %c0_17], %39 {strides = array<i32>} : memref<1x4x128xf32, #tpu.memory_space<vmem>>, vector<1x4x128xf32>,
    return
  }
  func.func @transform_0(%arg0: i32, %arg1: i32) -> (i32, i32, i32) {
    %c0_i32 = arith.constant 0 : i32
    %c0_i32_0 = arith.constant 0 : i32
    %c0_i32_1 = arith.constant 0 : i32
    return %arg0, %c0_i32, %c0_i32_0 : i32, i32, i32
  }
  func.func @transform_1(%arg0: i32, %arg1: i32) -> (i32, i32) {
    %c0_i32 = arith.constant 0 : i32
    %c0_i32_0 = arith.constant 0 : i32
    %c0_i32_1 = arith.constant 0 : i32
    return %c0_i32, %c0_i32_0 : i32, i32
  }
  func.func @transform_2(%arg0: i32, %arg1: i32) -> (i32, i32) {
    %c0_i32 = arith.constant 0 : i32
    %c0_i32_0 = arith.constant 0 : i32
    %c0_i32_1 = arith.constant 0 : i32
    return %c0_i32, %c0_i32_0 : i32, i32
  }
  func.func @transform_3(%arg0: i32, %arg1: i32) -> (i32, i32) {
    %c0_i32 = arith.constant 0 : i32
    %c0_i32_0 = arith.constant 0 : i32
    %c0_i32_1 = arith.constant 0 : i32
    return %c0_i32, %c0_i32_0 : i32, i32
  }
  func.func @transform_4(%arg0: i32, %arg1: i32) -> (i32, i32) {
    %c0_i32 = arith.constant 0 : i32
    %c0_i32_0 = arith.constant 0 : i32
    %c0_i32_1 = arith.constant 0 : i32
    return %c0_i32, %c0_i32_0 : i32, i32
  }
  func.func @transform_5(%arg0: i32, %arg1: i32) -> (i32, i32) {
    %c0_i32 = arith.constant 0 : i32
    %c0_i32_0 = arith.constant 0 : i32
    %c0_i32_1 = arith.constant 0 : i32
    return %c0_i32, %c0_i32_0 : i32, i32
  }
  func.func @transform_6(%arg0: i32, %arg1: i32) -> (i32, i32) {
    %c0_i32 = arith.constant 0 : i32
    %c0_i32_0 = arith.constant 0 : i32
    %c0_i32_1 = arith.constant 0 : i32
    return %c0_i32, %c0_i32_0 : i32, i32
  }
  func.func @transform_7(%arg0: i32, %arg1: i32) -> (i32, i32) {
    %c0_i32 = arith.constant 0 : i32
    %c0_i32_0 = arith.constant 0 : i32
    %c0_i32_1 = arith.constant 0 : i32
    return %c0_i32, %c0_i32_0 : i32, i32
  }
  func.func @transform_8(%arg0: i32, %arg1: i32) -> (i32, i32, i32) {
    %c0_i32 = arith.constant 0 : i32
    %c0_i32_0 = arith.constant 0 : i32
    return %arg0, %c0_i32, %arg1 : i32, i32, i32
  }
}

</mosaic_0001>

<llo_original>
// kernel: tpu_custom_call.1
$region0: #{tpu_custom_call.1}
  #allocation0 [shape = 'u32[]', space=smem, size = 0x4, offset = 0x4, fixed_abs, tag = 'smem constant byte address 0x4 - core index']
  #allocation1 [shape = 'u32[144,128]{1,0:T(1,128)}', space=vmem, size = 0x12000, scoped, tag = 'internal scratch']
  #allocation2 [shape = 'f32[1,256]{1,0:T(1,128)}', space=vmem, size = 0x400, scoped, tag = 'scratch operand']
  #allocation3 [shape = 'f32[5,256]{1,0:T(8,128)}', space=vmem, size = 0x2000, scoped, tag = 'scratch operand']
  #allocation4 [shape = 'f32[1,1]{1,0:T(1,128)S(1)}', space=vmem, size = 0x200, scoped, tag = 'scoped memory for tpu_custom_call.1']
  #allocation5 [shape = 'f32[1,1]{1,0:T(1,128)S(1)}', space=vmem, size = 0x200, scoped, tag = 'scoped memory for tpu_custom_call.1']
  #allocation6 [shape = 'f32[1,1]{1,0:T(1,128)S(1)}', space=vmem, size = 0x200, scoped, tag = 'scoped memory for tpu_custom_call.1']
  %s0 = inlined_call_operand.vmem [shape: f32[2,4,256], index: 0, kind: input, shape index: {}]
  %s1 = inlined_call_operand.vmem [shape: f32[4,1], index: 1, kind: input, shape index: {}]
  %s2 = inlined_call_operand.<no memory space> [shape: f32[1,1], index: 2, kind: input, shape index: {}]
  %s3 = inlined_call_operand.vmem [shape: f32[1,4], index: 3, kind: input, shape index: {}]
  %s4 = inlined_call_operand.<no memory space> [shape: f32[1,1], index: 4, kind: input, shape index: {}]
  %s5 = inlined_call_operand.vmem [shape: f32[5,4], index: 5, kind: input, shape index: {}]
  %s6 = inlined_call_operand.vmem [shape: f32[5,1], index: 6, kind: input, shape index: {}]
  %s7 = inlined_call_operand.<no memory space> [shape: f32[1,1], index: 7, kind: input, shape index: {}]
  %s8 = inlined_call_operand.hbm [shape: f32[2,4,256], index: 8, kind: output, shape index: {}]
  %s9 = sld [smem:[#allocation0]]
  $region69: #{tpu_custom_call.1} parent=0
    _
  %s11 = ssub.s32 1, %s9
  %s12 = scalar_select 0, %s11, %s9
  %v13 = vstv %s2
  %14 = vst [vmem:[#allocation4] sm:$0x1] %v13
  %v15 = vstv %s4
  %16 = vst [vmem:[#allocation5] sm:$0x1] %v15
  %v17 = vstv %s7
  %18 = vst [vmem:[#allocation6] sm:$0x1] %v17
  $region1: #{tpu_custom_call.1} parent=0
    #allocation7 [shape = 'u8[4096]{0}', space=vmem, size = 0x1000, scoped, tag = 'output window, operand 0']
    #allocation8 [shape = 's32[2]{0}', space=sflag, size = 0x8, scoped, tag = 'scoped memory for tpu_custom_call.1']
    %19 = vsyncpa [#allocation8], 0
    %s20 = scalar_lea.sflag [#allocation8], 1
    %21 = vsyncpa %s20, 0
    loop: start=0, step=1, limit=6
    $region2: #{tpu_custom_call.1} parent=1 // loop_pre_header
      _
    $region3: #{tpu_custom_call.1} parent=1 // loop_header
      %s23 = sphi 0, %s27
      %p24 = scmp.ge.s32.totalorder %s23, 6
      %s30 = sphi 0, %s42
      %s31 = sphi 0, %s38
      %s32 = sphi 0, %s30
      %s33 = sphi 0, %s31
      %s34 = sphi 0, %s32
      %s35 = sphi 0, %s33
      %s45 = sphi 0, %s47
      %s48 = sphi 0, %s45
      %s49 = sphi 0, %s48
      %s65 = sphi 0, %s49
      %s69 = sphi 0, %s69
      %s71 = sphi 0, %s69
      %s72 = sphi 0, %s71
      %s86 = sphi 0, %s72
      %s90 = sphi 0, %s90
      %s92 = sphi 0, %s90
      %s93 = sphi 0, %s92
      %s107 = sphi 0, %s93
      %s111 = sphi 0, %s111
      %s113 = sphi 0, %s111
      %s114 = sphi 0, %s113
      %s128 = sphi 0, %s114
      %s132 = sphi 0, %s132
      %s134 = sphi 0, %s132
      %s135 = sphi 0, %s134
      %s149 = sphi 0, %s135
      %s153 = sphi 0, %s153
      %s155 = sphi 0, %s153
      %s156 = sphi 0, %s155
      %s170 = sphi 0, %s156
      %s174 = sphi 0, %s174
      %s176 = sphi 0, %s174
      %s177 = sphi 0, %s176
      %s191 = sphi 0, %s177
      %s195 = sphi 0, %s195
      %s197 = sphi 0, %s195
      %s198 = sphi 0, %s197
      %s212 = sphi 0, %s198
      %s220 = sphi 0, %s222
      %s223 = sphi 0, %s220
      %s224 = sphi 0, %s223
      %s240 = sphi 0, %s224
    $region4: #{tpu_custom_call.1} parent=1 // loop_header_branch
      %26 = sbr.rel (%p24) target = $region8
    $region5: #{tpu_custom_call.1} parent=1 // loop_body
      %s28 = ssub.s32 %s23, 1
      %s29 = ssub.s32 %s23, 2
      %s36 = sadd.s32 1, %s31
      %p37 = scmp.ge.s32.totalorder %s36, 2
      %s38 = scalar_select %p37, 0, %s36
      %s39 = sadd.s32 1, %s30
      %s40 = scalar_select %p37, %s39, %s30
      %p41 = scmp.ge.s32.totalorder %s40, 2
      %s42 = scalar_select %p41, 0, %s40
      %s43 = ssub.s32 %s30, %s42
      %p44 = scmp.eq.s32.totalorder %s43, 0
      %s46 = sadd.s32 %s45, 1
      %s47 = scalar_select %p44, %s45, %s46
      %p50 = pneg %p44
      %p51 = scmp.eq.s32.totalorder %s23, 3
      %p52 = por %p50, %p51
      %p53 = scmp.ne.s32.totalorder %s45, %s48
      %p54 = scmp.eq.s32.totalorder %s23, 0
      %p55 = por %p53, %p54
      %p56 = scmp.ne.s32.totalorder %s45, %s48
      %p57 = scmp.eq.s32.totalorder %s28, 3
      %p58 = por %p56, %p57
      %p59 = scmp.ne.s32.totalorder %s48, %s49
      %p60 = scmp.eq.s32.totalorder %s28, 0
      %p61 = por %p59, %p60
      %p62 = scmp.ne.s32.totalorder %s48, %s49
      %p63 = scmp.eq.s32.totalorder %s29, 3
      %p64 = por %p62, %p63
      %p66 = scmp.ne.s32.totalorder %s49, %s65
      %p67 = scmp.eq.s32.totalorder %s29, 0
      %p68 = por %p66, %p67
      %s70 = sadd.s32 %s69, 1
      %p73 = scmp.eq.s32.totalorder %s23, 3
      %p74 = scmp.ne.s32.totalorder %s69, %s71
      %p75 = scmp.eq.s32.totalorder %s23, 0
      %p76 = por %p74, %p75
      %p77 = scmp.ne.s32.totalorder %s69, %s71
      %p78 = scmp.eq.s32.totalorder %s28, 3
      %p79 = por %p77, %p78
      %p80 = scmp.ne.s32.totalorder %s71, %s72
      %p81 = scmp.eq.s32.totalorder %s28, 0
      %p82 = por %p80, %p81
      %p83 = scmp.ne.s32.totalorder %s71, %s72
      %p84 = scmp.eq.s32.totalorder %s29, 3
      %p85 = por %p83, %p84
      %p87 = scmp.ne.s32.totalorder %s72, %s86
      %p88 = scmp.eq.s32.totalorder %s29, 0
      %p89 = por %p87, %p88
      %s91 = sadd.s32 %s90, 1
      %p94 = scmp.eq.s32.totalorder %s23, 3
      %p95 = scmp.ne.s32.totalorder %s90, %s92
      %p96 = scmp.eq.s32.totalorder %s23, 0
      %p97 = por %p95, %p96
      %p98 = scmp.ne.s32.totalorder %s90, %s92
      %p99 = scmp.eq.s32.totalorder %s28, 3
      %p100 = por %p98, %p99
      %p101 = scmp.ne.s32.totalorder %s92, %s93
      %p102 = scmp.eq.s32.totalorder %s28, 0
      %p103 = por %p101, %p102
      %p104 = scmp.ne.s32.totalorder %s92, %s93
      %p105 = scmp.eq.s32.totalorder %s29, 3
      %p106 = por %p104, %p105
      %p108 = scmp.ne.s32.totalorder %s93, %s107
      %p109 = scmp.eq.s32.totalorder %s29, 0
      %p110 = por %p108, %p109
      %s112 = sadd.s32 %s111, 1
      %p115 = scmp.eq.s32.totalorder %s23, 3
      %p116 = scmp.ne.s32.totalorder %s111, %s113
      %p117 = scmp.eq.s32.totalorder %s23, 0
      %p118 = por %p116, %p117
      %p119 = scmp.ne.s32.totalorder %s111, %s113
      %p120 = scmp.eq.s32.totalorder %s28, 3
      %p121 = por %p119, %p120
      %p122 = scmp.ne.s32.totalorder %s113, %s114
      %p123 = scmp.eq.s32.totalorder %s28, 0
      %p124 = por %p122, %p123
      %p125 = scmp.ne.s32.totalorder %s113, %s114
      %p126 = scmp.eq.s32.totalorder %s29, 3
      %p127 = por %p125, %p126
      %p129 = scmp.ne.s32.totalorder %s114, %s128
      %p130 = scmp.eq.s32.totalorder %s29, 0
      %p131 = por %p129, %p130
      %s133 = sadd.s32 %s132, 1
      %p136 = scmp.eq.s32.totalorder %s23, 3
      %p137 = scmp.ne.s32.totalorder %s132, %s134
      %p138 = scmp.eq.s32.totalorder %s23, 0
      %p139 = por %p137, %p138
      %p140 = scmp.ne.s32.totalorder %s132, %s134
      %p141 = scmp.eq.s32.totalorder %s28, 3
      %p142 = por %p140, %p141
      %p143 = scmp.ne.s32.totalorder %s134, %s135
      %p144 = scmp.eq.s32.totalorder %s28, 0
      %p145 = por %p143, %p144
      %p146 = scmp.ne.s32.totalorder %s134, %s135
      %p147 = scmp.eq.s32.totalorder %s29, 3
      %p148 = por %p146, %p147
      %p150 = scmp.ne.s32.totalorder %s135, %s149
      %p151 = scmp.eq.s32.totalorder %s29, 0
      %p152 = por %p150, %p151
      %s154 = sadd.s32 %s153, 1
      %p157 = scmp.eq.s32.totalorder %s23, 3
      %p158 = scmp.ne.s32.totalorder %s153, %s155
      %p159 = scmp.eq.s32.totalorder %s23, 0
      %p160 = por %p158, %p159
      %p161 = scmp.ne.s32.totalorder %s153, %s155
      %p162 = scmp.eq.s32.totalorder %s28, 3
      %p163 = por %p161, %p162
      %p164 = scmp.ne.s32.totalorder %s155, %s156
      %p165 = scmp.eq.s32.totalorder %s28, 0
      %p166 = por %p164, %p165
      %p167 = scmp.ne.s32.totalorder %s155, %s156
      %p168 = scmp.eq.s32.totalorder %s29, 3
      %p169 = por %p167, %p168
      %p171 = scmp.ne.s32.totalorder %s156, %s170
      %p172 = scmp.eq.s32.totalorder %s29, 0
      %p173 = por %p171, %p172
      %s175 = sadd.s32 %s174, 1
      %p178 = scmp.eq.s32.totalorder %s23, 3
      %p179 = scmp.ne.s32.totalorder %s174, %s176
      %p180 = scmp.eq.s32.totalorder %s23, 0
      %p181 = por %p179, %p180
      %p182 = scmp.ne.s32.totalorder %s174, %s176
      %p183 = scmp.eq.s32.totalorder %s28, 3
      %p184 = por %p182, %p183
      %p185 = scmp.ne.s32.totalorder %s176, %s177
      %p186 = scmp.eq.s32.totalorder %s28, 0
      %p187 = por %p185, %p186
      %p188 = scmp.ne.s32.totalorder %s176, %s177
      %p189 = scmp.eq.s32.totalorder %s29, 3
      %p190 = por %p188, %p189
      %p192 = scmp.ne.s32.totalorder %s177, %s191
      %p193 = scmp.eq.s32.totalorder %s29, 0
      %p194 = por %p192, %p193
      %s196 = sadd.s32 %s195, 1
      %p199 = scmp.eq.s32.totalorder %s23, 3
      %p200 = scmp.ne.s32.totalorder %s195, %s197
      %p201 = scmp.eq.s32.totalorder %s23, 0
      %p202 = por %p200, %p201
      %p203 = scmp.ne.s32.totalorder %s195, %s197
      %p204 = scmp.eq.s32.totalorder %s28, 3
      %p205 = por %p203, %p204
      %p206 = scmp.ne.s32.totalorder %s197, %s198
      %p207 = scmp.eq.s32.totalorder %s28, 0
      %p208 = por %p206, %p207
      %p209 = scmp.ne.s32.totalorder %s197, %s198
      %p210 = scmp.eq.s32.totalorder %s29, 3
      %p211 = por %p209, %p210
      %p213 = scmp.ne.s32.totalorder %s198, %s212
      %p214 = scmp.eq.s32.totalorder %s29, 0
      %p215 = por %p213, %p214
      %s216 = ssub.s32 %s30, %s42
      %s217 = ssub.s32 %s31, %s38
      %s218 = sor.u32 %s216, %s217
      %p219 = scmp.eq.s32.totalorder %s218, 0
      %s221 = sadd.s32 %s220, 1
      %s222 = scalar_select %p219, %s220, %s221
      %p225 = pneg %p219
      %p226 = scmp.eq.s32.totalorder %s23, 3
      %p227 = por %p225, %p226
      %p228 = scmp.ne.s32.totalorder %s220, %s223
      %p229 = scmp.eq.s32.totalorder %s23, 0
      %p230 = por %p228, %p229
      %p231 = scmp.ne.s32.totalorder %s220, %s223
      %p232 = scmp.eq.s32.totalorder %s28, 3
      %p233 = por %p231, %p232
      %p234 = scmp.ne.s32.totalorder %s223, %s224
      %p235 = scmp.eq.s32.totalorder %s28, 0
      %p236 = por %p234, %p235
      %p237 = scmp.ne.s32.totalorder %s223, %s224
      %p238 = scmp.eq.s32.totalorder %s29, 3
      %p239 = por %p237, %p238
      %p241 = scmp.ne.s32.totalorder %s224, %s240
      %p242 = scmp.eq.s32.totalorder %s29, 0
      %p243 = por %p241, %p242
      %p244 = scmp.le.s32.totalorder 1, %s23
      %p245 = scmp.lt.s32.totalorder %s23, 5
      %p246 = pnand %p244, %p245
      %p247 = pneg %p246
      // Predicated region
      $region9: #{tpu_custom_call.1} parent=5 // pred_check
        _
      $region10: #{tpu_custom_call.1} parent=5 // pred_check_branch
        %249 = sbr.rel (%p246) target = $region12
      $region11: #{tpu_custom_call.1} parent=5 // pred_region
        %s250 = ssub.s32 %s23, 1
        // Predicated region
        $region13: #{tpu_custom_call.1} parent=11 // pred_check
          %p251 = pneg %p82
        $region14: #{tpu_custom_call.1} parent=11 // pred_check_branch
          %253 = sbr.rel (%p251) target = $region16
        $region15: #{tpu_custom_call.1} parent=11 // pred_region
          _
        $region16: #{tpu_custom_call.1} parent=11 // pred_fallthru
          _
        // Predicated region
        $region17: #{tpu_custom_call.1} parent=11 // pred_check
          %p254 = pneg %p103
        $region18: #{tpu_custom_call.1} parent=11 // pred_check_branch
          %256 = sbr.rel (%p254) target = $region20
        $region19: #{tpu_custom_call.1} parent=11 // pred_region
          _
        $region20: #{tpu_custom_call.1} parent=11 // pred_fallthru
          _
        // Predicated region
        $region21: #{tpu_custom_call.1} parent=11 // pred_check
          %p257 = pneg %p124
        $region22: #{tpu_custom_call.1} parent=11 // pred_check_branch
          %259 = sbr.rel (%p257) target = $region24
        $region23: #{tpu_custom_call.1} parent=11 // pred_region
          _
        $region24: #{tpu_custom_call.1} parent=11 // pred_fallthru
          _
        // Predicated region
        $region25: #{tpu_custom_call.1} parent=11 // pred_check
          %p260 = pneg %p145
        $region26: #{tpu_custom_call.1} parent=11 // pred_check_branch
          %262 = sbr.rel (%p260) target = $region28
        $region27: #{tpu_custom_call.1} parent=11 // pred_region
          _
        $region28: #{tpu_custom_call.1} parent=11 // pred_fallthru
          _
        // Predicated region
        $region29: #{tpu_custom_call.1} parent=11 // pred_check
          %p263 = pneg %p166
        $region30: #{tpu_custom_call.1} parent=11 // pred_check_branch
          %265 = sbr.rel (%p263) target = $region32
        $region31: #{tpu_custom_call.1} parent=11 // pred_region
          _
        $region32: #{tpu_custom_call.1} parent=11 // pred_fallthru
          _
        // Predicated region
        $region33: #{tpu_custom_call.1} parent=11 // pred_check
          %p266 = pneg %p187
        $region34: #{tpu_custom_call.1} parent=11 // pred_check_branch
          %268 = sbr.rel (%p266) target = $region36
        $region35: #{tpu_custom_call.1} parent=11 // pred_region
          _
        $region36: #{tpu_custom_call.1} parent=11 // pred_fallthru
          _
        // Predicated region
        $region37: #{tpu_custom_call.1} parent=11 // pred_check
          %p269 = pneg %p208
        $region38: #{tpu_custom_call.1} parent=11 // pred_check_branch
          %271 = sbr.rel (%p269) target = $region40
        $region39: #{tpu_custom_call.1} parent=11 // pred_region
          _
        $region40: #{tpu_custom_call.1} parent=11 // pred_fallthru
          _
      $region12: #{tpu_custom_call.1} parent=5 // pred_fallthru
        _
      %p272 = scmp.lt.s32.totalorder %s23, 4
      // Predicated region
      $region41: #{tpu_custom_call.1} parent=5 // pred_check
        %p273 = pneg %p272
      $region42: #{tpu_custom_call.1} parent=5 // pred_check_branch
        %275 = sbr.rel (%p273) target = $region44
      $region43: #{tpu_custom_call.1} parent=5 // pred_region
        // Predicated region
        $region45: #{tpu_custom_call.1} parent=43 // pred_check
          %p276 = pneg %p55
        $region46: #{tpu_custom_call.1} parent=43 // pred_check_branch
          %278 = sbr.rel (%p276) target = $region48
        $region47: #{tpu_custom_call.1} parent=43 // pred_region
          %p279 = scmp.lt.s32.totalorder %s30, 1
          %s280 = scalar_select %p279, %s30, 1
          %s281 = smul.addr %s280, 2
          %s282 = smul.addr %s281, 4
          %s283 = scalar_lea.vmem %s0, %s282
        $region48: #{tpu_custom_call.1} parent=43 // pred_fallthru
          _
      $region44: #{tpu_custom_call.1} parent=5 // pred_fallthru
        _
      %p284 = scmp.le.s32.totalorder 1, %s23
      %p285 = scmp.lt.s32.totalorder %s23, 5
      %p286 = pnand %p284, %p285
      %p287 = pneg %p286
      // Predicated region
      $region49: #{tpu_custom_call.1} parent=5 // pred_check
        _
      $region50: #{tpu_custom_call.1} parent=5 // pred_check_branch
        %289 = sbr.rel (%p286) target = $region52
      $region51: #{tpu_custom_call.1} parent=5 // pred_region
        %s290 = ssub.s32 %s23, 1
        %p291 = scmp.lt.s32.totalorder %s32, 1
        %s292 = scalar_select %p291, %s32, 1
        %s293 = smul.addr %s292, 2
        %s294 = smul.addr %s293, 4
        %s295 = scalar_lea.vmem %s0, %s294
        %p296 = pneg %p61
        %p297 = pneg %p58
        %p298 = pneg %p82
        %p299 = pneg %p79
        %p300 = pneg %p103
        %p301 = pneg %p100
        %p302 = pneg %p124
        %p303 = pneg %p121
        %p304 = pneg %p145
        %p305 = pneg %p142
        %p306 = pneg %p166
        %p307 = pneg %p163
        %p308 = pneg %p187
        %p309 = pneg %p184
        %p310 = pneg %p208
        %p311 = pneg %p205
        %p312 = pneg %p236
        %p313 = pneg %p233
        %s314 = sand.u32 %s223, 1
        %s315 = scalar_lea.sflag [#allocation8], %s314
        %s316 = sand.u32 %s223, 1
        %s317 = smul.addr %s316, 4
        %s318 = scalar_lea.vmem [#allocation7], %s317
        %p319 = scmp.lt.s32.totalorder %s32, 1
        %s320 = scalar_select %p319, %s32, 1
        %s321 = smul.addr %s320, 2
        %s322 = smul.addr %s321, 4
        %s323 = scalar_lea.vmem %s0, %s322
        %p324 = scmp.eq.s32.totalorder %s33, 0
        // Predicated region
        $region53: #{tpu_custom_call.1} parent=51 // pred_check
          %p325 = pneg %p324
        $region54: #{tpu_custom_call.1} parent=51 // pred_check_branch
          %327 = sbr.rel (%p325) target = $region56
        $region55: #{tpu_custom_call.1} parent=51 // pred_region
          %v328 = vld [vmem:[%s323] sm:$0xff]
          %v329 = vld [vmem:[%s3] sm:$0x1]
          %v330 = vld [vmem:[#allocation5] sm:$0x1]
          %332 = vset.pattern.permute.xlu0 0
          %333 = vperm.xlu0 %332, %v330
          %v334 = vpop.permute.xlu0 %333
          %v336 = vlaneseq
          %v337 = vshrl.u32 %v336, 7
          %v338 = vsub.s32 0, %v337
          %v339 = vrot.slane %v334, %v338
          %v341 = vcombine.high %v328, %v328
          %vm342 = vcmask 31744
          %v344 = vsel %vm342, %v329, 0
          %vm346 = vcmask 1043456
          %v347 = vsel %vm346, %v328, 0
          %v349 = vsel %vm346, %v341, 0
          %351 = vmatprep.subr.mxu0 %v349
          %352 = vmatpush1.msra.mxu0 %v347
          %353 = vmatprep.subr.mxu0 0.0
          %354 = vmatpush1.msra.mxu0 0.0
          %355 = vmatprep.subr.mxu0 0.0
          %356 = vmatpush1.msra.mxu0 0.0
          %357 = vmatprep.subr.mxu0 0.0
          %358 = vmatpush1.msra.mxu0 0.0
          %359 = vmatprep.subr.mxu0 0.0
          %360 = vmatpush1.msra.mxu0 0.0
          %361 = vmatprep.subr.mxu0 0.0
          %362 = vmatpush1.msra.mxu0 0.0
          %363 = vmatprep.subr.mxu0 0.0
          %364 = vmatpush1.msra.mxu0 0.0
          %365 = vmatprep.subr.mxu0 0.0
          %366 = vmatpush1.msra.mxu0 0.0
          %367 = vmatprep.subr.mxu0 0.0
          %368 = vmatpush1.msra.mxu0 0.0
          %369 = vmatprep.subr.mxu0 0.0
          %370 = vmatpush1.msra.mxu0 0.0
          %371 = vmatprep.subr.mxu0 0.0
          %372 = vmatpush1.msra.mxu0 0.0
          %373 = vmatprep.subr.mxu0 0.0
          %374 = vmatpush1.msra.mxu0 0.0
          %375 = vmatprep.subr.mxu0 0.0
          %376 = vmatpush1.msra.mxu0 0.0
          %377 = vmatprep.subr.mxu0 0.0
          %378 = vmatpush1.msra.mxu0 0.0
          %379 = vmatprep.subr.mxu0 0.0
          %380 = vmatpush1.msra.mxu0 0.0
          %381 = vmatprep.subr.mxu0 0.0
          %382 = vmatpush1.msra.mxu0 0.0
          %383 = vmatprep.subr.mxu0 0.0
          %384 = vmatpush1.msra.mxu0 0.0
          %385 = vmatprep.subr.mxu0 0.0
          %386 = vmatpush1.msra.mxu0 0.0
          %387 = vmatprep.subr.mxu0 0.0
          %388 = vmatpush1.msra.mxu0 0.0
          %389 = vmatprep.subr.mxu0 0.0
          %390 = vmatpush1.msra.mxu0 0.0
          %391 = vmatprep.subr.mxu0 0.0
          %392 = vmatpush1.msra.mxu0 0.0
          %393 = vmatprep.subr.mxu0 0.0
          %394 = vmatpush1.msra.mxu0 0.0
          %395 = vmatprep.subr.mxu0 0.0
          %396 = vmatpush1.msra.mxu0 0.0
          %397 = vmatprep.subr.mxu0 0.0
          %398 = vmatpush1.msra.mxu0 0.0
          %399 = vmatprep.subr.mxu0 0.0
          %400 = vmatpush1.msra.mxu0 0.0
          %401 = vmatprep.subr.mxu0 0.0
          %402 = vmatpush1.msra.mxu0 0.0
          %403 = vmatprep.subr.mxu0 0.0
          %404 = vmatpush1.msra.mxu0 0.0
          %405 = vmatprep.subr.mxu0 0.0
          %406 = vmatpush1.msra.mxu0 0.0
          %407 = vmatprep.subr.mxu0 0.0
          %408 = vmatpush1.msra.mxu0 0.0
          %409 = vmatprep.subr.mxu0 0.0
          %410 = vmatpush1.msra.mxu0 0.0
          %411 = vmatprep.subr.mxu0 0.0
          %412 = vmatpush1.msra.mxu0 0.0
          %413 = vmatprep.subr.mxu0 0.0
          %414 = vmatpush1.msra.mxu0 0.0
          %415 = vmatprep.mubr.f32.mxu0 0.0
          %416 = vmatmul.mubr.f32.gmra.mrb[0].mxu0 %v344
          %v417 = vpop.f32.mrb[0].mxu0
          %v418 = vadd.f32 %v339, %v417
          %v419 = vpop.f32.mrb[0].mxu0
          %v420 = vadd.f32 %v339, %v419
          %421 = vdwg.mxu0
          %v424 = vcombine.low %v418, %v420
          %v426 = vunpack.c.l.s4 1966171168
          %v427 = vunpack.c.0.s8 %v426
          %v428 = vlaneseq
          %v429 = vshrl.u32 %v428, 7
          %v430 = vsub.s32 %v427, %v429
          %v431 = vrot.slane %v424, %v430
          %v433 = vunpack.c.l.s4 1966171168
          %v434 = vunpack.c.0.s8 %v433
          %v435 = vlaneseq
          %v436 = vshrl.u32 %v435, 7
          %v437 = vsub.s32 %v434, %v436
          %v438 = vrot.slane %v431, %v437
          %v440 = vlaneseq
          %vm441 = vcmp.ge.s32.totalorder %v440, 0
          %vm442 = vcmp.lt.s32.totalorder %v440, 256
          %vm443 = vmand %vm441, %vm442
          %444 = vst.msk [vmem:[#allocation2] sm:$0x3] %vm443, %v438
          %v445 = vld [vmem:[%s5] sm:$0x1f]
          %v446 = vld [vmem:[%s6] sm:$0x1f]
          %448 = vset.pattern.permute.xlu0 0
          %449 = vperm.xlu0 %448, %v446
          %v450 = vpop.permute.xlu0 %449
          %v453 = vsel %vm342, %v445, 0
          %455 = vmatprep.subr.mxu0 %v349
          %456 = vmatpush1.msra.mxu0 %v347
          %457 = vmatprep.subr.mxu0 0.0
          %458 = vmatpush1.msra.mxu0 0.0
          %459 = vmatprep.subr.mxu0 0.0
          %460 = vmatpush1.msra.mxu0 0.0
          %461 = vmatprep.subr.mxu0 0.0
          %462 = vmatpush1.msra.mxu0 0.0
          %463 = vmatprep.subr.mxu0 0.0
          %464 = vmatpush1.msra.mxu0 0.0
          %465 = vmatprep.subr.mxu0 0.0
          %466 = vmatpush1.msra.mxu0 0.0
          %467 = vmatprep.subr.mxu0 0.0
          %468 = vmatpush1.msra.mxu0 0.0
          %469 = vmatprep.subr.mxu0 0.0
          %470 = vmatpush1.msra.mxu0 0.0
          %471 = vmatprep.subr.mxu0 0.0
          %472 = vmatpush1.msra.mxu0 0.0
          %473 = vmatprep.subr.mxu0 0.0
          %474 = vmatpush1.msra.mxu0 0.0
          %475 = vmatprep.subr.mxu0 0.0
          %476 = vmatpush1.msra.mxu0 0.0
          %477 = vmatprep.subr.mxu0 0.0
          %478 = vmatpush1.msra.mxu0 0.0
          %479 = vmatprep.subr.mxu0 0.0
          %480 = vmatpush1.msra.mxu0 0.0
          %481 = vmatprep.subr.mxu0 0.0
          %482 = vmatpush1.msra.mxu0 0.0
          %483 = vmatprep.subr.mxu0 0.0
          %484 = vmatpush1.msra.mxu0 0.0
          %485 = vmatprep.subr.mxu0 0.0
          %486 = vmatpush1.msra.mxu0 0.0
          %487 = vmatprep.subr.mxu0 0.0
          %488 = vmatpush1.msra.mxu0 0.0
          %489 = vmatprep.subr.mxu0 0.0
          %490 = vmatpush1.msra.mxu0 0.0
          %491 = vmatprep.subr.mxu0 0.0
          %492 = vmatpush1.msra.mxu0 0.0
          %493 = vmatprep.subr.mxu0 0.0
          %494 = vmatpush1.msra.mxu0 0.0
          %495 = vmatprep.subr.mxu0 0.0
          %496 = vmatpush1.msra.mxu0 0.0
          %497 = vmatprep.subr.mxu0 0.0
          %498 = vmatpush1.msra.mxu0 0.0
          %499 = vmatprep.subr.mxu0 0.0
          %500 = vmatpush1.msra.mxu0 0.0
          %501 = vmatprep.subr.mxu0 0.0
          %502 = vmatpush1.msra.mxu0 0.0
          %503 = vmatprep.subr.mxu0 0.0
          %504 = vmatpush1.msra.mxu0 0.0
          %505 = vmatprep.subr.mxu0 0.0
          %506 = vmatpush1.msra.mxu0 0.0
          %507 = vmatprep.subr.mxu0 0.0
          %508 = vmatpush1.msra.mxu0 0.0
          %509 = vmatprep.subr.mxu0 0.0
          %510 = vmatpush1.msra.mxu0 0.0
          %511 = vmatprep.subr.mxu0 0.0
          %512 = vmatpush1.msra.mxu0 0.0
          %513 = vmatprep.subr.mxu0 0.0
          %514 = vmatpush1.msra.mxu0 0.0
          %515 = vmatprep.subr.mxu0 0.0
          %516 = vmatpush1.msra.mxu0 0.0
          %517 = vmatprep.subr.mxu0 0.0
          %518 = vmatpush1.msra.mxu0 0.0
          %519 = vmatprep.mubr.f32.mxu0 0.0
          %520 = vmatmul.mubr.f32.gmra.mrb[0].mxu0 %v453
          %v521 = vpop.f32.mrb[0].mxu0
          %v522 = vadd.f32 %v450, %v521
          %v523 = vpop.f32.mrb[0].mxu0
          %v524 = vadd.f32 %v450, %v523
          %525 = vdwg.mxu0
          %526 = vst [vmem:[#allocation3] sm:$0x1f] %v522
          %527 = vst [vmem:[#allocation3 + $0x8] sm:$0x1f] %v524
        $region56: #{tpu_custom_call.1} parent=51 // pred_fallthru
          _
        %s528 = smul.u32 %s33, 128
        %s529 = sshra.s32 %s528, 7
        %s530 = sand.u32 %s528, 127
        %s531 = smul.addr %s529, 4
        %s532 = scalar_lea.vmem %s323, %s531
        %v533 = vld [vmem:[%s532] sm:$0xf]
        %v534 = vld [vmem:[%s1] sm:$0xf]
        %v535 = vld [vmem:[#allocation4] sm:$0x1]
        %v537 = vlaneseq
        %v538 = vshrl.u32 %v537, 7
        %v539 = vsub.s32 0, %v538
        %v540 = vrot.slane %v535, %v539
        %542 = vxpose.xlu0.b32.start [1/16] %v533, 128
        %543 = vxpose.xlu0.b32.cont [2/16] 0.0, 128
        %544 = vxpose.xlu0.b32.cont [3/16] 0.0, 128
        %545 = vxpose.xlu0.b32.cont [4/16] 0.0, 128
        %546 = vxpose.xlu0.b32.cont [5/16] 0.0, 128
        %547 = vxpose.xlu0.b32.cont [6/16] 0.0, 128
        %548 = vxpose.xlu0.b32.cont [7/16] 0.0, 128
        %549 = vxpose.xlu0.b32.cont [8/16] 0.0, 128
        %550 = vxpose.xlu0.b32.cont [9/16] 0.0, 128
        %551 = vxpose.xlu0.b32.cont [10/16] 0.0, 128
        %552 = vxpose.xlu0.b32.cont [11/16] 0.0, 128
        %553 = vxpose.xlu0.b32.cont [12/16] 0.0, 128
        %554 = vxpose.xlu0.b32.cont [13/16] 0.0, 128
        %555 = vxpose.xlu0.b32.cont [14/16] 0.0, 128
        %556 = vxpose.xlu0.b32.cont [15/16] 0.0, 128
        %557 = vxpose.xlu0.b32.end [16/16] 0.0, 128
        %v558 = vpop.trf.xlu0
        %v559 = vpop.trf.xlu0
        %v560 = vpop.trf.xlu0
        %v561 = vpop.trf.xlu0
        %v562 = vpop.trf.xlu0
        %v563 = vpop.trf.xlu0
        %v564 = vpop.trf.xlu0
        %v565 = vpop.trf.xlu0
        %v566 = vpop.trf.xlu0
        %v567 = vpop.trf.xlu0
        %v568 = vpop.trf.xlu0
        %v569 = vpop.trf.xlu0
        %v570 = vpop.trf.xlu0
        %v571 = vpop.trf.xlu0
        %v572 = vpop.trf.xlu0
        %v573 = vpop.trf.xlu0
        %vm574 = vcmask 31744
        %v576 = vsel %vm574, %v558, 0
        %v579 = vsel %vm574, %v559, 0
        %v582 = vsel %vm574, %v560, 0
        %v585 = vsel %vm574, %v561, 0
        %v588 = vsel %vm574, %v562, 0
        %v591 = vsel %vm574, %v563, 0
        %v594 = vsel %vm574, %v564, 0
        %v597 = vsel %vm574, %v565, 0
        %v600 = vsel %vm574, %v566, 0
        %v603 = vsel %vm574, %v567, 0
        %v606 = vsel %vm574, %v568, 0
        %v609 = vsel %vm574, %v569, 0
        %v612 = vsel %vm574, %v570, 0
        %v615 = vsel %vm574, %v571, 0
        %v618 = vsel %vm574, %v572, 0
        %v621 = vsel %vm574, %v573, 0
        %vm623 = vcmask 1043456
        %v625 = vsel %vm623, %v534, 0
        %627 = vmatprep.subr.mxu0 0.0
        %628 = vmatpush1.msra.mxu0 %v625
        %629 = vmatprep.subr.mxu0 0.0
        %630 = vmatpush1.msra.mxu0 0.0
        %631 = vmatprep.subr.mxu0 0.0
        %632 = vmatpush1.msra.mxu0 0.0
        %633 = vmatprep.subr.mxu0 0.0
        %634 = vmatpush1.msra.mxu0 0.0
        %635 = vmatprep.subr.mxu0 0.0
        %636 = vmatpush1.msra.mxu0 0.0
        %637 = vmatprep.subr.mxu0 0.0
        %638 = vmatpush1.msra.mxu0 0.0
        %639 = vmatprep.subr.mxu0 0.0
        %640 = vmatpush1.msra.mxu0 0.0
        %641 = vmatprep.subr.mxu0 0.0
        %642 = vmatpush1.msra.mxu0 0.0
        %643 = vmatprep.subr.mxu0 0.0
        %644 = vmatpush1.msra.mxu0 0.0
        %645 = vmatprep.subr.mxu0 0.0
        %646 = vmatpush1.msra.mxu0 0.0
        %647 = vmatprep.subr.mxu0 0.0
        %648 = vmatpush1.msra.mxu0 0.0
        %649 = vmatprep.subr.mxu0 0.0
        %650 = vmatpush1.msra.mxu0 0.0
        %651 = vmatprep.subr.mxu0 0.0
        %652 = vmatpush1.msra.mxu0 0.0
        %653 = vmatprep.subr.mxu0 0.0
        %654 = vmatpush1.msra.mxu0 0.0
        %655 = vmatprep.subr.mxu0 0.0
        %656 = vmatpush1.msra.mxu0 0.0
        %657 = vmatprep.subr.mxu0 0.0
        %658 = vmatpush1.msra.mxu0 0.0
        %659 = vmatprep.subr.mxu0 0.0
        %660 = vmatpush1.msra.mxu0 0.0
        %661 = vmatprep.subr.mxu0 0.0
        %662 = vmatpush1.msra.mxu0 0.0
        %663 = vmatprep.subr.mxu0 0.0
        %664 = vmatpush1.msra.mxu0 0.0
        %665 = vmatprep.subr.mxu0 0.0
        %666 = vmatpush1.msra.mxu0 0.0
        %667 = vmatprep.subr.mxu0 0.0
        %668 = vmatpush1.msra.mxu0 0.0
        %669 = vmatprep.subr.mxu0 0.0
        %670 = vmatpush1.msra.mxu0 0.0
        %671 = vmatprep.subr.mxu0 0.0
        %672 = vmatpush1.msra.mxu0 0.0
        %673 = vmatprep.subr.mxu0 0.0
        %674 = vmatpush1.msra.mxu0 0.0
        %675 = vmatprep.subr.mxu0 0.0
        %676 = vmatpush1.msra.mxu0 0.0
        %677 = vmatprep.subr.mxu0 0.0
        %678 = vmatpush1.msra.mxu0 0.0
        %679 = vmatprep.subr.mxu0 0.0
        %680 = vmatpush1.msra.mxu0 0.0
        %681 = vmatprep.subr.mxu0 0.0
        %682 = vmatpush1.msra.mxu0 0.0
        %683 = vmatprep.subr.mxu0 0.0
        %684 = vmatpush1.msra.mxu0 0.0
        %685 = vmatprep.subr.mxu0 0.0
        %686 = vmatpush1.msra.mxu0 0.0
        %687 = vmatprep.subr.mxu0 0.0
        %688 = vmatpush1.msra.mxu0 0.0
        %689 = vmatprep.subr.mxu0 0.0
        %690 = vmatpush1.msra.mxu0 0.0
        %691 = vmatprep.mubr.f32.mxu0 0.0
        %692 = vmatmul.mubr.f32.gmra.mrb[0].mxu0 %v576
        %v693 = vpop.f32.mrb[0].mxu0
        %v694 = vadd.f32 %v540, %v693
        %v695 = vpop.f32.mrb[0].mxu0
        %696 = vmatprep.mubr.f32.mxu0 0.0
        %697 = vmatmul.mubr.f32.gmra.mrb[0].mxu0 %v579
        %v698 = vpop.f32.mrb[0].mxu0
        %v699 = vadd.f32 %v540, %v698
        %v700 = vpop.f32.mrb[0].mxu0
        %701 = vmatprep.mubr.f32.mxu0 0.0
        %702 = vmatmul.mubr.f32.gmra.mrb[0].mxu0 %v582
        %v703 = vpop.f32.mrb[0].mxu0
        %v704 = vadd.f32 %v540, %v703
        %v705 = vpop.f32.mrb[0].mxu0
        %706 = vmatprep.mubr.f32.mxu0 0.0
        %707 = vmatmul.mubr.f32.gmra.mrb[0].mxu0 %v585
        %v708 = vpop.f32.mrb[0].mxu0
        %v709 = vadd.f32 %v540, %v708
        %v710 = vpop.f32.mrb[0].mxu0
        %711 = vmatprep.mubr.f32.mxu0 0.0
        %712 = vmatmul.mubr.f32.gmra.mrb[0].mxu0 %v588
        %v713 = vpop.f32.mrb[0].mxu0
        %v714 = vadd.f32 %v540, %v713
        %v715 = vpop.f32.mrb[0].mxu0
        %716 = vmatprep.mubr.f32.mxu0 0.0
        %717 = vmatmul.mubr.f32.gmra.mrb[0].mxu0 %v591
        %v718 = vpop.f32.mrb[0].mxu0
        %v719 = vadd.f32 %v540, %v718
        %v720 = vpop.f32.mrb[0].mxu0
        %721 = vmatprep.mubr.f32.mxu0 0.0
        %722 = vmatmul.mubr.f32.gmra.mrb[0].mxu0 %v594
        %v723 = vpop.f32.mrb[0].mxu0
        %v724 = vadd.f32 %v540, %v723
        %v725 = vpop.f32.mrb[0].mxu0
        %726 = vmatprep.mubr.f32.mxu0 0.0
        %727 = vmatmul.mubr.f32.gmra.mrb[0].mxu0 %v597
        %v728 = vpop.f32.mrb[0].mxu0
        %v729 = vadd.f32 %v540, %v728
        %v730 = vpop.f32.mrb[0].mxu0
        %731 = vmatprep.mubr.f32.mxu0 0.0
        %732 = vmatmul.mubr.f32.gmra.mrb[0].mxu0 %v600
        %v733 = vpop.f32.mrb[0].mxu0
        %v734 = vadd.f32 %v540, %v733
        %v735 = vpop.f32.mrb[0].mxu0
        %736 = vmatprep.mubr.f32.mxu0 0.0
        %737 = vmatmul.mubr.f32.gmra.mrb[0].mxu0 %v603
        %v738 = vpop.f32.mrb[0].mxu0
        %v739 = vadd.f32 %v540, %v738
        %v740 = vpop.f32.mrb[0].mxu0
        %741 = vmatprep.mubr.f32.mxu0 0.0
        %742 = vmatmul.mubr.f32.gmra.mrb[0].mxu0 %v606
        %v743 = vpop.f32.mrb[0].mxu0
        %v744 = vadd.f32 %v540, %v743
        %v745 = vpop.f32.mrb[0].mxu0
        %746 = vmatprep.mubr.f32.mxu0 0.0
        %747 = vmatmul.mubr.f32.gmra.mrb[0].mxu0 %v609
        %v748 = vpop.f32.mrb[0].mxu0
        %v749 = vadd.f32 %v540, %v748
        %v750 = vpop.f32.mrb[0].mxu0
        %751 = vmatprep.mubr.f32.mxu0 0.0
        %752 = vmatmul.mubr.f32.gmra.mrb[0].mxu0 %v612
        %v753 = vpop.f32.mrb[0].mxu0
        %v754 = vadd.f32 %v540, %v753
        %v755 = vpop.f32.mrb[0].mxu0
        %756 = vmatprep.mubr.f32.mxu0 0.0
        %757 = vmatmul.mubr.f32.gmra.mrb[0].mxu0 %v615
        %v758 = vpop.f32.mrb[0].mxu0
        %v759 = vadd.f32 %v540, %v758
        %v760 = vpop.f32.mrb[0].mxu0
        %761 = vmatprep.mubr.f32.mxu0 0.0
        %762 = vmatmul.mubr.f32.gmra.mrb[0].mxu0 %v618
        %v763 = vpop.f32.mrb[0].mxu0
        %v764 = vadd.f32 %v540, %v763
        %v765 = vpop.f32.mrb[0].mxu0
        %766 = vmatprep.mubr.f32.mxu0 0.0
        %767 = vmatmul.mubr.f32.gmra.mrb[0].mxu0 %v621
        %v768 = vpop.f32.mrb[0].mxu0
        %v769 = vadd.f32 %v540, %v768
        %v770 = vpop.f32.mrb[0].mxu0
        %771 = vdwg.mxu0
        %v772 = vld [vmem:[#allocation2] sm:$0x3]
        %774 = vset.pattern.permute.xlu0 0
        %775 = vperm.xlu0 %774, %v694
        %v776 = vpop.permute.xlu0 %775
        %779 = vset.pattern.permute.xlu0 0
        %780 = vperm.xlu0 %779, %v699
        %v781 = vpop.permute.xlu0 %780
        %784 = vset.pattern.permute.xlu0 0
        %785 = vperm.xlu0 %784, %v704
        %v786 = vpop.permute.xlu0 %785
        %789 = vset.pattern.permute.xlu0 0
        %790 = vperm.xlu0 %789, %v709
        %v791 = vpop.permute.xlu0 %790
        %794 = vset.pattern.permute.xlu0 0
        %795 = vperm.xlu0 %794, %v714
        %v796 = vpop.permute.xlu0 %795
        %799 = vset.pattern.permute.xlu0 0
        %800 = vperm.xlu0 %799, %v719
        %v801 = vpop.permute.xlu0 %800
        %804 = vset.pattern.permute.xlu0 0
        %805 = vperm.xlu0 %804, %v724
        %v806 = vpop.permute.xlu0 %805
        %809 = vset.pattern.permute.xlu0 0
        %810 = vperm.xlu0 %809, %v729
        %v811 = vpop.permute.xlu0 %810
        %814 = vset.pattern.permute.xlu0 0
        %815 = vperm.xlu0 %814, %v734
        %v816 = vpop.permute.xlu0 %815
        %819 = vset.pattern.permute.xlu0 0
        %820 = vperm.xlu0 %819, %v739
        %v821 = vpop.permute.xlu0 %820
        %824 = vset.pattern.permute.xlu0 0
        %825 = vperm.xlu0 %824, %v744
        %v826 = vpop.permute.xlu0 %825
        %829 = vset.pattern.permute.xlu0 0
        %830 = vperm.xlu0 %829, %v749
        %v831 = vpop.permute.xlu0 %830
        %834 = vset.pattern.permute.xlu0 0
        %835 = vperm.xlu0 %834, %v754
        %v836 = vpop.permute.xlu0 %835
        %839 = vset.pattern.permute.xlu0 0
        %840 = vperm.xlu0 %839, %v759
        %v841 = vpop.permute.xlu0 %840
        %844 = vset.pattern.permute.xlu0 0
        %845 = vperm.xlu0 %844, %v764
        %v846 = vpop.permute.xlu0 %845
        %849 = vset.pattern.permute.xlu0 0
        %850 = vperm.xlu0 %849, %v769
        %v851 = vpop.permute.xlu0 %850
        %v854 = vlaneseq
        %v855 = vshrl.u32 %v854, 7
        %v856 = vsub.s32 0, %v855
        %v857 = vrot.slane %v772, %v856
        %v858 = vlaneseq
        %v859 = vshrl.u32 %v858, 7
        %v860 = vsub.s32 1, %v859
        %v861 = vrot.slane %v772, %v860
        %v864 = vmul.f32 %v776, %v857
        %v865 = vmul.f32 %v776, %v861
        %v866 = vmul.f32 %v781, %v857
        %v867 = vmul.f32 %v781, %v861
        %v868 = vmul.f32 %v786, %v857
        %v869 = vmul.f32 %v786, %v861
        %v870 = vmul.f32 %v791, %v857
        %v871 = vmul.f32 %v791, %v861
        %v872 = vmul.f32 %v796, %v857
        %v873 = vmul.f32 %v796, %v861
        %v874 = vmul.f32 %v801, %v857
        %v875 = vmul.f32 %v801, %v861
        %v876 = vmul.f32 %v806, %v857
        %v877 = vmul.f32 %v806, %v861
        %v878 = vmul.f32 %v811, %v857
        %v879 = vmul.f32 %v811, %v861
        %v880 = vmul.f32 %v816, %v857
        %v881 = vmul.f32 %v816, %v861
        %v882 = vmul.f32 %v821, %v857
        %v883 = vmul.f32 %v821, %v861
        %v884 = vmul.f32 %v826, %v857
        %v885 = vmul.f32 %v826, %v861
        %v886 = vmul.f32 %v831, %v857
        %v887 = vmul.f32 %v831, %v861
        %v888 = vmul.f32 %v836, %v857
        %v889 = vmul.f32 %v836, %v861
        %v890 = vmul.f32 %v841, %v857
        %v891 = vmul.f32 %v841, %v861
        %v892 = vmul.f32 %v846, %v857
        %v893 = vmul.f32 %v846, %v861
        %v894 = vmul.f32 %v851, %v857
        %v895 = vmul.f32 %v851, %v861
        %v896 = vmax.f32 %v864, %v865
        %897 = vmax.xlane.f32.xlu0 %v896
        %v898 = vpop.xlane.xlu0 %897
        %v899 = vmax.f32 %v866, %v867
        %900 = vmax.xlane.f32.xlu0 %v899
        %v901 = vpop.xlane.xlu0 %900
        %v902 = vmax.f32 %v868, %v869
        %903 = vmax.xlane.f32.xlu0 %v902
        %v904 = vpop.xlane.xlu0 %903
        %v905 = vmax.f32 %v870, %v871
        %906 = vmax.xlane.f32.xlu0 %v905
        %v907 = vpop.xlane.xlu0 %906
        %v908 = vmax.f32 %v872, %v873
        %909 = vmax.xlane.f32.xlu0 %v908
        %v910 = vpop.xlane.xlu0 %909
        %v911 = vmax.f32 %v874, %v875
        %912 = vmax.xlane.f32.xlu0 %v911
        %v913 = vpop.xlane.xlu0 %912
        %v914 = vmax.f32 %v876, %v877
        %915 = vmax.xlane.f32.xlu0 %v914
        %v916 = vpop.xlane.xlu0 %915
        %v917 = vmax.f32 %v878, %v879
        %918 = vmax.xlane.f32.xlu0 %v917
        %v919 = vpop.xlane.xlu0 %918
        %v920 = vmax.f32 %v880, %v881
        %921 = vmax.xlane.f32.xlu0 %v920
        %v922 = vpop.xlane.xlu0 %921
        %v923 = vmax.f32 %v882, %v883
        %924 = vmax.xlane.f32.xlu0 %v923
        %v925 = vpop.xlane.xlu0 %924
        %v926 = vmax.f32 %v884, %v885
        %927 = vmax.xlane.f32.xlu0 %v926
        %v928 = vpop.xlane.xlu0 %927
        %v929 = vmax.f32 %v886, %v887
        %930 = vmax.xlane.f32.xlu0 %v929
        %v931 = vpop.xlane.xlu0 %930
        %v932 = vmax.f32 %v888, %v889
        %933 = vmax.xlane.f32.xlu0 %v932
        %v934 = vpop.xlane.xlu0 %933
        %v935 = vmax.f32 %v890, %v891
        %936 = vmax.xlane.f32.xlu0 %v935
        %v937 = vpop.xlane.xlu0 %936
        %v938 = vmax.f32 %v892, %v893
        %939 = vmax.xlane.f32.xlu0 %v938
        %v940 = vpop.xlane.xlu0 %939
        %v941 = vmax.f32 %v894, %v895
        %942 = vmax.xlane.f32.xlu0 %v941
        %v943 = vpop.xlane.xlu0 %942
        %v944 = vsub.f32 %v864, %v898
        %v945 = vsub.f32 %v865, %v898
        %v946 = vsub.f32 %v866, %v901
        %v947 = vsub.f32 %v867, %v901
        %v948 = vsub.f32 %v868, %v904
        %v949 = vsub.f32 %v869, %v904
        %v950 = vsub.f32 %v870, %v907
        %v951 = vsub.f32 %v871, %v907
        %v952 = vsub.f32 %v872, %v910
        %v953 = vsub.f32 %v873, %v910
        %v954 = vsub.f32 %v874, %v913
        %v955 = vsub.f32 %v875, %v913
        %v956 = vsub.f32 %v876, %v916
        %v957 = vsub.f32 %v877, %v916
        %v958 = vsub.f32 %v878, %v919
        %v959 = vsub.f32 %v879, %v919
        %v960 = vsub.f32 %v880, %v922
        %v961 = vsub.f32 %v881, %v922
        %v962 = vsub.f32 %v882, %v925
        %v963 = vsub.f32 %v883, %v925
        %v964 = vsub.f32 %v884, %v928
        %v965 = vsub.f32 %v885, %v928
        %v966 = vsub.f32 %v886, %v931
        %v967 = vsub.f32 %v887, %v931
        %v968 = vsub.f32 %v888, %v934
        %v969 = vsub.f32 %v889, %v934
        %v970 = vsub.f32 %v890, %v937
        %v971 = vsub.f32 %v891, %v937
        %v972 = vsub.f32 %v892, %v940
        %v973 = vsub.f32 %v893, %v940
        %v974 = vsub.f32 %v894, %v943
        %v975 = vsub.f32 %v895, %v943
        %v976 = vmul.f32 %v944, 1.442695
        %v977 = vpow.pop %v976
        %v978 = vmul.f32 %v945, 1.442695
        %v979 = vpow.pop %v978
        %v980 = vmul.f32 %v946, 1.442695
        %v981 = vpow.pop %v980
        %v982 = vmul.f32 %v947, 1.442695
        %v983 = vpow.pop %v982
        %v984 = vmul.f32 %v948, 1.442695
        %v985 = vpow.pop %v984
        %v986 = vmul.f32 %v949, 1.442695
        %v987 = vpow.pop %v986
        %v988 = vmul.f32 %v950, 1.442695
        %v989 = vpow.pop %v988
        %v990 = vmul.f32 %v951, 1.442695
        %v991 = vpow.pop %v990
        %v992 = vmul.f32 %v952, 1.442695
        %v993 = vpow.pop %v992
        %v994 = vmul.f32 %v953, 1.442695
        %v995 = vpow.pop %v994
        %v996 = vmul.f32 %v954, 1.442695
        %v997 = vpow.pop %v996
        %v998 = vmul.f32 %v955, 1.442695
        %v999 = vpow.pop %v998
        %v1000 = vmul.f32 %v956, 1.442695
        %v1001 = vpow.pop %v1000
        %v1002 = vmul.f32 %v957, 1.442695
        %v1003 = vpow.pop %v1002
        %v1004 = vmul.f32 %v958, 1.442695
        %v1005 = vpow.pop %v1004
        %v1006 = vmul.f32 %v959, 1.442695
        %v1007 = vpow.pop %v1006
        %v1008 = vmul.f32 %v960, 1.442695
        %v1009 = vpow.pop %v1008
        %v1010 = vmul.f32 %v961, 1.442695
        %v1011 = vpow.pop %v1010
        %v1012 = vmul.f32 %v962, 1.442695
        %v1013 = vpow.pop %v1012
        %v1014 = vmul.f32 %v963, 1.442695
        %v1015 = vpow.pop %v1014
        %v1016 = vmul.f32 %v964, 1.442695
        %v1017 = vpow.pop %v1016
        %v1018 = vmul.f32 %v965, 1.442695
        %v1019 = vpow.pop %v1018
        %v1020 = vmul.f32 %v966, 1.442695
        %v1021 = vpow.pop %v1020
        %v1022 = vmul.f32 %v967, 1.442695
        %v1023 = vpow.pop %v1022
        %v1024 = vmul.f32 %v968, 1.442695
        %v1025 = vpow.pop %v1024
        %v1026 = vmul.f32 %v969, 1.442695
        %v1027 = vpow.pop %v1026
        %v1028 = vmul.f32 %v970, 1.442695
        %v1029 = vpow.pop %v1028
        %v1030 = vmul.f32 %v971, 1.442695
        %v1031 = vpow.pop %v1030
        %v1032 = vmul.f32 %v972, 1.442695
        %v1033 = vpow.pop %v1032
        %v1034 = vmul.f32 %v973, 1.442695
        %v1035 = vpow.pop %v1034
        %v1036 = vmul.f32 %v974, 1.442695
        %v1037 = vpow.pop %v1036
        %v1038 = vmul.f32 %v975, 1.442695
        %v1039 = vpow.pop %v1038
        %v1040 = vld [vmem:[#allocation3] sm:$0x1f]
        %v1041 = vld [vmem:[#allocation3 + $0x8] sm:$0x1f]
        %1042 = vmatprep.subr.mxu0 %v979
        %1043 = vmatpush1.xpose.msra.mxu0 %v977
        %1044 = vmatprep.subr.mxu0 %v983
        %1045 = vmatpush1.xpose.msra.mxu0 %v981
        %1046 = vmatprep.subr.mxu0 %v987
        %1047 = vmatpush1.xpose.msra.mxu0 %v985
        %1048 = vmatprep.subr.mxu0 %v991
        %1049 = vmatpush1.xpose.msra.mxu0 %v989
        %1050 = vmatprep.subr.mxu0 %v995
        %1051 = vmatpush1.xpose.msra.mxu0 %v993
        %1052 = vmatprep.subr.mxu0 %v999
        %1053 = vmatpush1.xpose.msra.mxu0 %v997
        %1054 = vmatprep.subr.mxu0 %v1003
        %1055 = vmatpush1.xpose.msra.mxu0 %v1001
        %1056 = vmatprep.subr.mxu0 %v1007
        %1057 = vmatpush1.xpose.msra.mxu0 %v1005
        %1058 = vmatprep.subr.mxu0 %v1011
        %1059 = vmatpush1.xpose.msra.mxu0 %v1009
        %1060 = vmatprep.subr.mxu0 %v1015
        %1061 = vmatpush1.xpose.msra.mxu0 %v1013
        %1062 = vmatprep.subr.mxu0 %v1019
        %1063 = vmatpush1.xpose.msra.mxu0 %v1017
        %1064 = vmatprep.subr.mxu0 %v1023
        %1065 = vmatpush1.xpose.msra.mxu0 %v1021
        %1066 = vmatprep.subr.mxu0 %v1027
        %1067 = vmatpush1.xpose.msra.mxu0 %v1025
        %1068 = vmatprep.subr.mxu0 %v1031
        %1069 = vmatpush1.xpose.msra.mxu0 %v1029
        %1070 = vmatprep.subr.mxu0 %v1035
        %1071 = vmatpush1.xpose.msra.mxu0 %v1033
        %1072 = vmatprep.subr.mxu0 %v1039
        %1073 = vmatpush1.xpose.msra.mxu0 %v1037
        %1074 = vmatprep.subr.mxu0 0.0
        %1075 = vmatpush1.xpose.msra.mxu0 0.0
        %1076 = vmatprep.subr.mxu0 0.0
        %1077 = vmatpush1.xpose.msra.mxu0 0.0
        %1078 = vmatprep.subr.mxu0 0.0
        %1079 = vmatpush1.xpose.msra.mxu0 0.0
        %1080 = vmatprep.subr.mxu0 0.0
        %1081 = vmatpush1.xpose.msra.mxu0 0.0
        %1082 = vmatprep.subr.mxu0 0.0
        %1083 = vmatpush1.xpose.msra.mxu0 0.0
        %1084 = vmatprep.subr.mxu0 0.0
        %1085 = vmatpush1.xpose.msra.mxu0 0.0
        %1086 = vmatprep.subr.mxu0 0.0
        %1087 = vmatpush1.xpose.msra.mxu0 0.0
        %1088 = vmatprep.subr.mxu0 0.0
        %1089 = vmatpush1.xpose.msra.mxu0 0.0
        %1090 = vmatprep.subr.mxu0 0.0
        %1091 = vmatpush1.xpose.msra.mxu0 0.0
        %1092 = vmatprep.subr.mxu0 0.0
        %1093 = vmatpush1.xpose.msra.mxu0 0.0
        %1094 = vmatprep.subr.mxu0 0.0
        %1095 = vmatpush1.xpose.msra.mxu0 0.0
        %1096 = vmatprep.subr.mxu0 0.0
        %1097 = vmatpush1.xpose.msra.mxu0 0.0
        %1098 = vmatprep.subr.mxu0 0.0
        %1099 = vmatpush1.xpose.msra.mxu0 0.0
        %1100 = vmatprep.subr.mxu0 0.0
        %1101 = vmatpush1.xpose.msra.mxu0 0.0
        %1102 = vmatprep.subr.mxu0 0.0
        %1103 = vmatpush1.xpose.msra.mxu0 0.0
        %1104 = vmatprep.subr.mxu0 0.0
        %1105 = vmatpush1.xpose.msra.mxu0 0.0
        %1106 = vmatprep.mubr.f32.mxu0 %v1041
        %1107 = vmatmul.mubr.f32.gmra.mrb[0].mxu0 %v1040
        %v1108 = vpop.f32.mrb[0].mxu0
        %v1109 = vadd.f32 0.0, %v1108
        %v1110 = vpop.f32.mrb[0].mxu0
        %1111 = vdwg.mxu0
        %v1112 = vrcp.pop %v1109
        %v1113 = vmul.f32 %v1109, %v1112
        %v1114 = vsub.f32 2.0, %v1113
        %v1115 = vmul.f32 %v1112, %v1114
        %v1116 = vld [vmem:[#allocation6] sm:$0x1]
        %v1117 = vlaneseq
        %v1118 = vshrl.u32 %v1117, 7
        %v1119 = vsub.s32 4, %v1118
        %v1120 = vrot.slane %v1115, %v1119
        %v1121 = vmul.f32 %v1109, %v1120
        %v1123 = vlaneseq
        %v1124 = vshrl.u32 %v1123, 7
        %v1125 = vsub.s32 0, %v1124
        %v1126 = vrot.slane %v1116, %v1125
        %1127 = vset.pattern.permute.xlu0 0
        %1128 = vperm.xlu0 %1127, %v1126
        %v1129 = vpop.permute.xlu0 %1128
        %v1131 = vmul.f32 %v1129, %v1121
        %v1132 = vadd.f32 %v1131, %v533
        %1133 = vst [vmem:[%s318] sm:$0xf] %v1132
        %s1134 = sand.u32 %s223, 1
        %s1135 = scalar_lea.sflag [#allocation8], %s1134
        %s1136 = sand.u32 %s223, 1
        %s1137 = smul.addr %s1136, 4
        %s1138 = scalar_lea.vmem [#allocation7], %s1137
        // Predicated region
        $region57: #{tpu_custom_call.1} parent=51 // pred_check
          %p1139 = pneg %p233
        $region58: #{tpu_custom_call.1} parent=51 // pred_check_branch
          %1141 = sbr.rel (%p1139) target = $region60
        $region59: #{tpu_custom_call.1} parent=51 // pred_region
          %s1143 = ssub.s32 64, 64
          %1144 = vsyncadd %s1135, %s1143
          %s1145 = smul.addr %s32, 2
          %s1146 = sadd.s32 %s33, %s1145
          %s1147 = smul.addr %s1146, 64
          %s1148 = scalar_lea.hbm %s8, %s1147
          %s1150 = sshll.u32 %s1138, 4
          %s1151 = int_to_ptr.vmem [resolvable:$true] %s1150
          %1153 = dma.vmem_to_hbm [thread:$0]  %s1151, 64, %s1148, %s1135
        $region60: #{tpu_custom_call.1} parent=51 // pred_fallthru
          _
      $region52: #{tpu_custom_call.1} parent=5 // pred_fallthru
        _
      %p1154 = scmp.le.s32.totalorder 2, %s23
      // Predicated region
      $region61: #{tpu_custom_call.1} parent=5 // pred_check
        %p1155 = pneg %p1154
      $region62: #{tpu_custom_call.1} parent=5 // pred_check_branch
        %1157 = sbr.rel (%p1155) target = $region64
      $region63: #{tpu_custom_call.1} parent=5 // pred_region
        %s1158 = ssub.s32 %s23, 2
        // Predicated region
        $region65: #{tpu_custom_call.1} parent=63 // pred_check
          %p1159 = pneg %p239
        $region66: #{tpu_custom_call.1} parent=63 // pred_check_branch
          %1161 = sbr.rel (%p1159) target = $region68
        $region67: #{tpu_custom_call.1} parent=63 // pred_region
          %s1162 = sand.u32 %s224, 1
          %s1163 = scalar_lea.sflag [#allocation8], %s1162
          %s1164 = sand.u32 %s224, 1
          %s1165 = smul.addr %s1164, 4
          %s1166 = scalar_lea.vmem [#allocation7], %s1165
          %1167 = dma.done %s1163, 64
        $region68: #{tpu_custom_call.1} parent=63 // pred_fallthru
          _
      $region64: #{tpu_custom_call.1} parent=5 // pred_fallthru
        _
    $region6: #{tpu_custom_call.1} parent=1 // loop_footer
      %s27 = sadd.s32 1, %s23
    $region7: #{tpu_custom_call.1} parent=1 // loop_footer_branch
      %22 = sbr.rel target = $region3
    $region8: #{tpu_custom_call.1} parent=1 // loop_exit
      _
    %1168 = vsyncpa [#allocation8], 1
    %s1169 = scalar_lea.sflag [#allocation8], 1
    %1170 = vsyncpa %s1169, 1

</llo_original>
